<compile_context>
chip_gen: v7x
topology: tpu7x:2x2x1
jax: 0.10.0
libtpu: 0.0.40
codegen_flags: <defaults>
</compile_context>

<pallas_src>
import jax
import jax.numpy as jnp
from jax.experimental import pallas as pl
from jax.experimental.pallas import tpu as pltpu


def _round_up(x, m):
    return ((x + m - 1) // m) * m


def _reward_kernel(belief_ref, state_ref, w_ref, b3_ref, o_ref):
    Db = belief_ref.shape[1]
    Ds = state_ref.shape[1]
    H = w_ref.shape[1]
    D = Db + Ds

    # Static carve-out of the packed parameter slab (rows: W1 | W2 | b1 b2 w3).
    w1a = w_ref[0:Db, :]                     # W1[:Db]      (Db, H)
    w1b = w_ref[Db:D, :]                     # W1[Db:]      (Ds, H)
    w2 = w_ref[D:D + H, :]                   # W2           (H, H)
    b1 = w_ref[D + H:D + H + 1, :]           # b1           (1, H)
    b2 = w_ref[D + H + 1:D + H + 2, :]       # b2           (1, H)
    w3 = w_ref[D + H + 2:D + H + 3, :]       # fc3 weight   (1, H)

    # fc1 with fused concat: x @ W1 == belief @ W1[:Db] + state @ W1[Db:]
    h = (jnp.dot(belief_ref[...], w1a, preferred_element_type=jnp.float32)
         + jnp.dot(state_ref[...], w1b, preferred_element_type=jnp.float32)
         + b1)
    h = jnp.maximum(h, 0.0)                                            # relu
    # fc2
    h = jnp.dot(h, w2, preferred_element_type=jnp.float32) + b2
    h = jnp.maximum(h, 0.0)                                            # relu
    # fc3 (out_features=1): contract the hidden axis of h against the (1, H)
    # w3 row on the MXU -> result is (1, TB) with batch already on the lane
    # axis, so the lane-dense store needs no sublane->lane relayout.
    r = jax.lax.dot_general(w3, h, (((1,), (1,)), ((), ())),
                            preferred_element_type=jnp.float32)        # (1, TB)
    o_ref[...] = (r + b3_ref[0, 0]).astype(o_ref.dtype)


def reward_model_forward(belief, state, params):
    """Pallas implementation of RewardModel.forward.

    belief: (B, belief_size) f32; state: (B, state_size) f32 -> reward (B,) f32.
    """
    B, Db = belief.shape
    Bs, Ds = state.shape
    assert B == Bs
    w = params["w"]
    H = w.shape[1]
    D = Db + Ds
    assert w.shape[0] == D + H + 3

    # Batch tile: multiple of 128 (lane-dense output). When the batch spans
    # more than one minimal tile, aim for two grid steps so the "parallel"
    # axis keeps both v7x TensorCores busy; cap at 2048 rows (double-buffered
    # f32 tiles stay far below every generation's VMEM budget).
    if B <= 128:
        TB = 128
    else:
        TB = min(2048, _round_up(pl.cdiv(B, 2), 128))
    grid = (pl.cdiv(B, TB),)   # ragged last tile handled by Pallas (no jnp.pad)

    flops = 2 * B * (D * H + H * H + H)
    bytes_accessed = 4 * (B * (D + 1) + (D + H + 3) * H + 1)

    out = pl.pallas_call(
        _reward_kernel,
        out_shape=jax.ShapeDtypeStruct((1, B), jnp.float32),
        grid=grid,
        in_specs=[
            pl.BlockSpec((TB, Db), lambda i: (i, 0)),                  # belief tile
            pl.BlockSpec((TB, Ds), lambda i: (i, 0)),                  # state tile
            pl.BlockSpec((D + H + 3, H), lambda i: (0, 0)),            # packed params (resident)
            pl.BlockSpec((1, 1), lambda i: (0, 0),
                         memory_space=pltpu.MemorySpace.SMEM),         # b3 scalar
        ],
        out_specs=pl.BlockSpec((1, TB), lambda i: (0, i)),             # lane-dense rewards
        compiler_params=pltpu.CompilerParams(
            dimension_semantics=("parallel",),
            vmem_limit_bytes=8 * 1024 * 1024,
        ),
        cost_estimate=pl.CostEstimate(
            flops=flops, transcendentals=0, bytes_accessed=bytes_accessed),
    )(belief, state, w, params["b3"])
    return out[0]                                                      # squeeze(dim=-1)


def init_params(key, belief_size, state_size, hidden_size):
    """nn.Linear-style init (uniform +/- 1/sqrt(fan_in)); weights stored as
    [in, out] (transposed vs torch) and packed into one (D+H+3, H) slab:
    rows [0:D)=W1, [D:D+H)=W2, then b1, b2, w3 (fc3 weight as a row)."""
    D = belief_size + state_size
    H = hidden_size
    ks = jax.random.split(key, 6)

    def linear(kw, kb, fan_in, fan_out):
        bound = 1.0 / jnp.sqrt(fan_in)
        w = jax.random.uniform(kw, (fan_in, fan_out), jnp.float32, -bound, bound)
        b = jax.random.uniform(kb, (1, fan_out), jnp.float32, -bound, bound)
        return w, b

    w1, b1 = linear(ks[0], ks[1], D, H)
    w2, b2 = linear(ks[2], ks[3], H, H)
    w3, b3 = linear(ks[4], ks[5], H, 1)
    packed = jnp.concatenate([w1, w2, b1, b2, w3.T], axis=0)   # (D+H+3, H)
    return {"w": packed, "b3": b3}


def _reference(belief, state, params):
    w, b3 = params["w"], params["b3"]
    Db, Ds = belief.shape[1], state.shape[1]
    H = w.shape[1]
    D = Db + Ds
    w1, w2 = w[:D], w[D:D + H]
    b1, b2, w3 = w[D + H], w[D + H + 1], w[D + H + 2]
    x = jnp.concatenate([belief, state], axis=1)
    h = jnp.maximum(x @ w1 + b1, 0.0)
    h = jnp.maximum(h @ w2 + b2, 0.0)
    return h @ w3 + b3[0, 0]


if __name__ == "__main__":
    belief_size, state_size, hidden_size = 16, 16, 32

    key = jax.random.PRNGKey(0)
    k_params, _, _ = jax.random.split(key, 3)
    params = init_params(k_params, belief_size, state_size, hidden_size)

    # batch=2: tiny single (ragged) tile case.
    # batch=600: ragged multi-tile case exercising the grid (TB=384, 2 tiles).
    for batch in (2, 600):
        kb, ks_ = jax.random.split(jax.random.fold_in(key, batch))
        belief = jax.random.normal(kb, (batch, belief_size), jnp.float32)
        state = jax.random.normal(ks_, (batch, state_size), jnp.float32)

        reward = reward_model_forward(belief, state, params)
        jax.block_until_ready(reward)

        ref = _reference(belief, state, params)
        assert reward.shape == (batch,)
        assert jnp.allclose(reward, ref, atol=1e-4, rtol=1e-4), (
            batch, float(jnp.max(jnp.abs(reward - ref))))

    print("KERNEL_OK")
</pallas_src>

<mosaic_0001>
module attributes {stable_mosaic.version = 11 : i64} {
  func.func @_reward_kernel(%arg0: i32, %arg1: memref<128x16xf32, #tpu.memory_space<vmem>>, %arg2: memref<128x16xf32, #tpu.memory_space<vmem>>, %arg3: memref<67x32xf32, #tpu.memory_space<vmem>>, %arg4: memref<1x1xf32, #tpu.memory_space<smem>>, %arg5: memref<1x128xf32, #tpu.memory_space<vmem>>) attributes {dimension_semantics = [#tpu.dimension_semantics<parallel>], iteration_bounds = array<i64: 1>, scalar_prefetch = 0 : i64, scratch_operands = 0 : i64, tpu.core_type = #tpu.core_type<tc>, window_params = [{transform_indices = @transform_0, window_bounds = array<i64: 128, 16>}, {transform_indices = @transform_1, window_bounds = array<i64: 128, 16>}, {pipeline_mode = #tpu.pipeline_mode<synchronous>, transform_indices = @transform_2, window_bounds = array<i64: 67, 32>}, {transform_indices = @transform_3, window_bounds = array<i64: 1, 1>}, {transform_indices = @transform_4, window_bounds = array<i64: 1, 128>}]} {
    %c0 = arith.constant 0 : index
    %c0_0 = arith.constant 0 : index
    %0 = vector.load %arg3[%c0, %c0_0] : memref<67x32xf32, #tpu.memory_space<vmem>>, vector<16x32xf32>
    %c16 = arith.constant 16 : index
    %c0_1 = arith.constant 0 : index
    %1 = vector.load %arg3[%c16, %c0_1] : memref<67x32xf32, #tpu.memory_space<vmem>>, vector<16x32xf32>
    %c32 = arith.constant 32 : index
    %c0_2 = arith.constant 0 : index
    %2 = vector.load %arg3[%c32, %c0_2] : memref<67x32xf32, #tpu.memory_space<vmem>>, vector<32x32xf32>
    %c64 = arith.constant 64 : index
    %c0_3 = arith.constant 0 : index
    %3 = vector.load %arg3[%c64, %c0_3] : memref<67x32xf32, #tpu.memory_space<vmem>>, vector<1x32xf32>
    %c65 = arith.constant 65 : index
    %c0_4 = arith.constant 0 : index
    %4 = vector.load %arg3[%c65, %c0_4] : memref<67x32xf32, #tpu.memory_space<vmem>>, vector<1x32xf32>
    %c66 = arith.constant 66 : index
    %c0_5 = arith.constant 0 : index
    %5 = vector.load %arg3[%c66, %c0_5] : memref<67x32xf32, #tpu.memory_space<vmem>>, vector<1x32xf32>
    %c0_6 = arith.constant 0 : index
    %c0_7 = arith.constant 0 : index
    %6 = vector.load %arg1[%c0_6, %c0_7] : memref<128x16xf32, #tpu.memory_space<vmem>>, vector<128x16xf32>
    %cst = arith.constant dense<0.000000e+00> : vector<128x32xf32>
    %7 = tpu.matmul %6, %0, %cst {dimension_numbers = #tpu.dot_dimension_numbers<[1], [0], [0], [1], [0, 0, 1, 1], [], []>} : vector<128x16xf32>, vector<16x32xf32>, vector<128x32xf32> -> vector<128x32xf32>
    %c0_8 = arith.constant 0 : index
    %c0_9 = arith.constant 0 : index
    %8 = vector.load %arg2[%c0_8, %c0_9] : memref<128x16xf32, #tpu.memory_space<vmem>>, vector<128x16xf32>
    %cst_10 = arith.constant dense<0.000000e+00> : vector<128x32xf32>
    %9 = tpu.matmul %8, %1, %cst_10 {dimension_numbers = #tpu.dot_dimension_numbers<[1], [0], [0], [1], [0, 0, 1, 1], [], []>} : vector<128x16xf32>, vector<16x32xf32>, vector<128x32xf32> -> vector<128x32xf32>
    %10 = arith.addf %7, %9 : vector<128x32xf32>
    %11 = vector.broadcast %3 : vector<1x32xf32> to vector<128x32xf32>
    %12 = arith.addf %10, %11 : vector<128x32xf32>
    %cst_11 = arith.constant 0.000000e+00 : f32
    %13 = vector.broadcast %cst_11 : f32 to vector<128x32xf32>
    %14 = arith.maximumf %12, %13 : vector<128x32xf32>
    %cst_12 = arith.constant dense<0.000000e+00> : vector<128x32xf32>
    %15 = tpu.matmul %14, %2, %cst_12 {dimension_numbers = #tpu.dot_dimension_numbers<[1], [0], [0], [1], [0, 0, 1, 1], [], []>} : vector<128x32xf32>, vector<32x32xf32>, vector<128x32xf32> -> vector<128x32xf32>
    %16 = vector.broadcast %4 : vector<1x32xf32> to vector<128x32xf32>
    %17 = arith.addf %15, %16 : vector<128x32xf32>
    %cst_13 = arith.constant 0.000000e+00 : f32
    %18 = vector.broadcast %cst_13 : f32 to vector<128x32xf32>
    %19 = arith.maximumf %17, %18 : vector<128x32xf32>
    %cst_14 = arith.constant dense<0.000000e+00> : vector<1x128xf32>
    %20 = tpu.matmul %5, %19, %cst_14 {dimension_numbers = #tpu.dot_dimension_numbers<[1], [1], [0], [0], [0, 0, 1, 0], [], []>} : vector<1x32xf32>, vector<128x32xf32>, vector<1x128xf32> -> vector<1x128xf32>
    %c0_15 = arith.constant 0 : index
    %c0_16 = arith.constant 0 : index
    %21 = memref.load %arg4[%c0_15, %c0_16] : memref<1x1xf32, #tpu.memory_space<smem>>
    %22 = vector.broadcast %21 : f32 to vector<1x128xf32>
    %23 = arith.addf %20, %22 : vector<1x128xf32>
    %c0_17 = arith.constant 0 : index
    %c0_18 = arith.constant 0 : index
    %24 = vector.load %arg5[%c0_17, %c0_18] : memref<1x128xf32, #tpu.memory_space<vmem>>, vector<1x128xf32>
    tpu.vector_store %arg5[%c0_17, %c0_18], %23 {strides = array<i32>} : memref<1x128xf32, #tpu.memory_space<vmem>>, vector<1x128xf32>,
    return
  }
  func.func @transform_0(%arg0: i32) -> (i32, i32) {
    %c0_i32 = arith.constant 0 : i32
    %c0_i32_0 = arith.constant 0 : i32
    return %arg0, %c0_i32 : i32, i32
  }
  func.func @transform_1(%arg0: i32) -> (i32, i32) {
    %c0_i32 = arith.constant 0 : i32
    %c0_i32_0 = arith.constant 0 : i32
    return %arg0, %c0_i32 : i32, i32
  }
  func.func @transform_2(%arg0: i32) -> (i32, i32) {
    %c0_i32 = arith.constant 0 : i32
    %c0_i32_0 = arith.constant 0 : i32
    %c0_i32_1 = arith.constant 0 : i32
    return %c0_i32, %c0_i32_0 : i32, i32
  }
  func.func @transform_3(%arg0: i32) -> (i32, i32) {
    %c0_i32 = arith.constant 0 : i32
    %c0_i32_0 = arith.constant 0 : i32
    %c0_i32_1 = arith.constant 0 : i32
    return %c0_i32, %c0_i32_0 : i32, i32
  }
  func.func @transform_4(%arg0: i32) -> (i32, i32) {
    %c0_i32 = arith.constant 0 : i32
    %c0_i32_0 = arith.constant 0 : i32
    return %c0_i32, %arg0 : i32, i32
  }
}

</mosaic_0001>

<llo_original>
// kernel: tpu_custom_call.1
$region0: #{tpu_custom_call.1}
  #allocation0 [shape = 'u32[]', space=smem, size = 0x4, offset = 0x4, fixed_abs, tag = 'smem constant byte address 0x4 - core index']
  #allocation1 [shape = 'u32[144,128]{1,0:T(1,128)}', space=vmem, size = 0x12000, scoped, tag = 'internal scratch']
  #allocation2 [shape = 'f32[1,1]{1,0:T(1,128)S(6)}', space=smem, size = 0x200, scoped, tag = 'scoped memory for tpu_custom_call.1']
  %s0 = inlined_call_operand.vmem [shape: f32[2,16], index: 0, kind: input, shape index: {}]
  %s1 = inlined_call_operand.vmem [shape: f32[2,16], index: 1, kind: input, shape index: {}]
  %s2 = inlined_call_operand.vmem [shape: f32[67,32], index: 2, kind: input, shape index: {}]
  %s3 = inlined_call_operand.<no memory space> [shape: f32[1,1], index: 3, kind: input, shape index: {}]
  %s4 = inlined_call_operand.hbm [shape: f32[1,2], index: 4, kind: output, shape index: {}]
  %s5 = sld [smem:[#allocation0]]
  $region26: #{tpu_custom_call.1} parent=0
    _
  %s7 = ssub.s32 1, %s5
  %s8 = scalar_select 0, %s7, %s5
  %9 = sst [smem:[#allocation2]] %s3
  $region1: #{tpu_custom_call.1} parent=0
    #allocation3 [shape = 'u8[512]{0}', space=vmem, size = 0x400, scoped, tag = 'output window, operand 0, single buffered']
    #allocation4 [shape = 's32[1]{0}', space=sflag, size = 0x4, scoped, tag = 'scoped memory for tpu_custom_call.1']
    %10 = vsyncpa [#allocation4], 0
    // Predicated region
    $region2: #{tpu_custom_call.1} parent=1 // pred_check
      _
    $region3: #{tpu_custom_call.1} parent=1 // pred_check_branch
      %12 = sbr.rel (0) target = $region5
    $region4: #{tpu_custom_call.1} parent=1 // pred_region
      _
    $region5: #{tpu_custom_call.1} parent=1 // pred_fallthru
      _
    // Predicated region
    $region6: #{tpu_custom_call.1} parent=1 // pred_check
      _
    $region7: #{tpu_custom_call.1} parent=1 // pred_check_branch
      %14 = sbr.rel (0) target = $region9
    $region8: #{tpu_custom_call.1} parent=1 // pred_region
      _
    $region9: #{tpu_custom_call.1} parent=1 // pred_fallthru
      _
    // Predicated region
    $region10: #{tpu_custom_call.1} parent=1 // pred_check
      _
    $region11: #{tpu_custom_call.1} parent=1 // pred_check_branch
      %16 = sbr.rel (0) target = $region13
    $region12: #{tpu_custom_call.1} parent=1 // pred_region
      _
    $region13: #{tpu_custom_call.1} parent=1 // pred_fallthru
      _
    // Predicated region
    $region14: #{tpu_custom_call.1} parent=1 // pred_check
      _
    $region15: #{tpu_custom_call.1} parent=1 // pred_check_branch
      %18 = sbr.rel (0) target = $region17
    $region16: #{tpu_custom_call.1} parent=1 // pred_region
      _
    $region17: #{tpu_custom_call.1} parent=1 // pred_fallthru
      _
    %v19 = vld [vmem:[%s2] sm:$0xff]
    %v20 = vld [vmem:[%s2 + $0x8] sm:$0xff]
    %v21 = vld [vmem:[%s2 + $0x10] sm:$0xff]
    %v22 = vld [vmem:[%s2 + $0x18] sm:$0xff]
    %v23 = vld [vmem:[%s2 + $0x20] sm:$0xff]
    %v24 = vld [vmem:[%s2 + $0x28] sm:$0xff]
    %v25 = vld [vmem:[%s2 + $0x30] sm:$0xff]
    %v26 = vld [vmem:[%s2 + $0x38] sm:$0xff]
    %v27 = vld [vmem:[%s2 + $0x40] sm:$0x1]
    %v28 = vld [vmem:[%s2 + $0x41] sm:$0x1]
    %v29 = vld [vmem:[%s2 + $0x42] sm:$0x1]
    %v30 = vld [vmem:[%s0] sm:$0xff]
    %v31 = vld [vmem:[%s0 + $0x8] sm:$0xff]
    %v32 = vld [vmem:[%s0 + $0x10] sm:$0xff]
    %v33 = vld [vmem:[%s0 + $0x18] sm:$0xff]
    %v34 = vld [vmem:[%s0 + $0x20] sm:$0xff]
    %v35 = vld [vmem:[%s0 + $0x28] sm:$0xff]
    %v36 = vld [vmem:[%s0 + $0x30] sm:$0xff]
    %v37 = vld [vmem:[%s0 + $0x38] sm:$0xff]
    %v38 = vld [vmem:[%s0 + $0x40] sm:$0xff]
    %v39 = vld [vmem:[%s0 + $0x48] sm:$0xff]
    %v40 = vld [vmem:[%s0 + $0x50] sm:$0xff]
    %v41 = vld [vmem:[%s0 + $0x58] sm:$0xff]
    %v42 = vld [vmem:[%s0 + $0x60] sm:$0xff]
    %v43 = vld [vmem:[%s0 + $0x68] sm:$0xff]
    %v44 = vld [vmem:[%s0 + $0x70] sm:$0xff]
    %v45 = vld [vmem:[%s0 + $0x78] sm:$0xff]
    %v46 = vld [vmem:[%s1] sm:$0xff]
    %v47 = vld [vmem:[%s1 + $0x8] sm:$0xff]
    %v48 = vld [vmem:[%s1 + $0x10] sm:$0xff]
    %v49 = vld [vmem:[%s1 + $0x18] sm:$0xff]
    %v50 = vld [vmem:[%s1 + $0x20] sm:$0xff]
    %v51 = vld [vmem:[%s1 + $0x28] sm:$0xff]
    %v52 = vld [vmem:[%s1 + $0x30] sm:$0xff]
    %v53 = vld [vmem:[%s1 + $0x38] sm:$0xff]
    %v54 = vld [vmem:[%s1 + $0x40] sm:$0xff]
    %v55 = vld [vmem:[%s1 + $0x48] sm:$0xff]
    %v56 = vld [vmem:[%s1 + $0x50] sm:$0xff]
    %v57 = vld [vmem:[%s1 + $0x58] sm:$0xff]
    %v58 = vld [vmem:[%s1 + $0x60] sm:$0xff]
    %v59 = vld [vmem:[%s1 + $0x68] sm:$0xff]
    %v60 = vld [vmem:[%s1 + $0x70] sm:$0xff]
    %v61 = vld [vmem:[%s1 + $0x78] sm:$0xff]
    %vm62 = vcmask 130048
    %v64 = vsel %vm62, %v46, 0
    %v67 = vsel %vm62, %v47, 0
    %v70 = vsel %vm62, %v48, 0
    %v73 = vsel %vm62, %v49, 0
    %v76 = vsel %vm62, %v50, 0
    %v79 = vsel %vm62, %v51, 0
    %v82 = vsel %vm62, %v52, 0
    %v85 = vsel %vm62, %v53, 0
    %v88 = vsel %vm62, %v54, 0
    %v91 = vsel %vm62, %v55, 0
    %v94 = vsel %vm62, %v56, 0
    %v97 = vsel %vm62, %v57, 0
    %v100 = vsel %vm62, %v58, 0
    %v103 = vsel %vm62, %v59, 0
    %v106 = vsel %vm62, %v60, 0
    %v109 = vsel %vm62, %v61, 0
    %111 = vmatprep.subr.mxu0 0.0
    %112 = vmatpush1.msra.mxu0 %v21
    %113 = vmatprep.subr.mxu0 0.0
    %114 = vmatpush1.msra.mxu0 %v22
    %115 = vmatprep.subr.mxu0 0.0
    %116 = vmatpush1.msra.mxu0 0.0
    %117 = vmatprep.subr.mxu0 0.0
    %118 = vmatpush1.msra.mxu0 0.0
    %119 = vmatprep.subr.mxu0 0.0
    %120 = vmatpush1.msra.mxu0 0.0
    %121 = vmatprep.subr.mxu0 0.0
    %122 = vmatpush1.msra.mxu0 0.0
    %123 = vmatprep.subr.mxu0 0.0
    %124 = vmatpush1.msra.mxu0 0.0
    %125 = vmatprep.subr.mxu0 0.0
    %126 = vmatpush1.msra.mxu0 0.0
    %127 = vmatprep.subr.mxu0 0.0
    %128 = vmatpush1.msra.mxu0 0.0
    %129 = vmatprep.subr.mxu0 0.0
    %130 = vmatpush1.msra.mxu0 0.0
    %131 = vmatprep.subr.mxu0 0.0
    %132 = vmatpush1.msra.mxu0 0.0
    %133 = vmatprep.subr.mxu0 0.0
    %134 = vmatpush1.msra.mxu0 0.0
    %135 = vmatprep.subr.mxu0 0.0
    %136 = vmatpush1.msra.mxu0 0.0
    %137 = vmatprep.subr.mxu0 0.0
    %138 = vmatpush1.msra.mxu0 0.0
    %139 = vmatprep.subr.mxu0 0.0
    %140 = vmatpush1.msra.mxu0 0.0
    %141 = vmatprep.subr.mxu0 0.0
    %142 = vmatpush1.msra.mxu0 0.0
    %143 = vmatprep.subr.mxu0 0.0
    %144 = vmatpush1.msra.mxu0 0.0
    %145 = vmatprep.subr.mxu0 0.0
    %146 = vmatpush1.msra.mxu0 0.0
    %147 = vmatprep.subr.mxu0 0.0
    %148 = vmatpush1.msra.mxu0 0.0
    %149 = vmatprep.subr.mxu0 0.0
    %150 = vmatpush1.msra.mxu0 0.0
    %151 = vmatprep.subr.mxu0 0.0
    %152 = vmatpush1.msra.mxu0 0.0
    %153 = vmatprep.subr.mxu0 0.0
    %154 = vmatpush1.msra.mxu0 0.0
    %155 = vmatprep.subr.mxu0 0.0
    %156 = vmatpush1.msra.mxu0 0.0
    %157 = vmatprep.subr.mxu0 0.0
    %158 = vmatpush1.msra.mxu0 0.0
    %159 = vmatprep.subr.mxu0 0.0
    %160 = vmatpush1.msra.mxu0 0.0
    %161 = vmatprep.subr.mxu0 0.0
    %162 = vmatpush1.msra.mxu0 0.0
    %163 = vmatprep.subr.mxu0 0.0
    %164 = vmatpush1.msra.mxu0 0.0
    %165 = vmatprep.subr.mxu0 0.0
    %166 = vmatpush1.msra.mxu0 0.0
    %167 = vmatprep.subr.mxu0 0.0
    %168 = vmatpush1.msra.mxu0 0.0
    %169 = vmatprep.subr.mxu0 0.0
    %170 = vmatpush1.msra.mxu0 0.0
    %171 = vmatprep.subr.mxu0 0.0
    %172 = vmatpush1.msra.mxu0 0.0
    %173 = vmatprep.subr.mxu0 0.0
    %174 = vmatpush1.msra.mxu0 0.0
    %175 = vmatprep.mubr.f32.mxu0 0.0
    %176 = vmatmul.mubr.f32.gmra.mrb[0].mxu0 %v64
    %v177 = vpop.f32.mrb[0].mxu0
    %v178 = vadd.f32 0.0, %v177
    %v179 = vpop.f32.mrb[0].mxu0
    %180 = vmatprep.mubr.f32.mxu0 0.0
    %181 = vmatmul.mubr.f32.gmra.mrb[0].mxu0 %v67
    %v182 = vpop.f32.mrb[0].mxu0
    %v183 = vadd.f32 0.0, %v182
    %v184 = vpop.f32.mrb[0].mxu0
    %185 = vmatprep.mubr.f32.mxu0 0.0
    %186 = vmatmul.mubr.f32.gmra.mrb[0].mxu0 %v70
    %v187 = vpop.f32.mrb[0].mxu0
    %v188 = vadd.f32 0.0, %v187
    %v189 = vpop.f32.mrb[0].mxu0
    %190 = vmatprep.mubr.f32.mxu0 0.0
    %191 = vmatmul.mubr.f32.gmra.mrb[0].mxu0 %v73
    %v192 = vpop.f32.mrb[0].mxu0
    %v193 = vadd.f32 0.0, %v192
    %v194 = vpop.f32.mrb[0].mxu0
    %195 = vmatprep.mubr.f32.mxu0 0.0
    %196 = vmatmul.mubr.f32.gmra.mrb[0].mxu0 %v76
    %v197 = vpop.f32.mrb[0].mxu0
    %v198 = vadd.f32 0.0, %v197
    %v199 = vpop.f32.mrb[0].mxu0
    %200 = vmatprep.mubr.f32.mxu0 0.0
    %201 = vmatmul.mubr.f32.gmra.mrb[0].mxu0 %v79
    %v202 = vpop.f32.mrb[0].mxu0
    %v203 = vadd.f32 0.0, %v202
    %v204 = vpop.f32.mrb[0].mxu0
    %205 = vmatprep.mubr.f32.mxu0 0.0
    %206 = vmatmul.mubr.f32.gmra.mrb[0].mxu0 %v82
    %v207 = vpop.f32.mrb[0].mxu0
    %v208 = vadd.f32 0.0, %v207
    %v209 = vpop.f32.mrb[0].mxu0
    %210 = vmatprep.mubr.f32.mxu0 0.0
    %211 = vmatmul.mubr.f32.gmra.mrb[0].mxu0 %v85
    %v212 = vpop.f32.mrb[0].mxu0
    %v213 = vadd.f32 0.0, %v212
    %v214 = vpop.f32.mrb[0].mxu0
    %215 = vmatprep.mubr.f32.mxu0 0.0
    %216 = vmatmul.mubr.f32.gmra.mrb[0].mxu0 %v88
    %v217 = vpop.f32.mrb[0].mxu0
    %v218 = vadd.f32 0.0, %v217
    %v219 = vpop.f32.mrb[0].mxu0
    %220 = vmatprep.mubr.f32.mxu0 0.0
    %221 = vmatmul.mubr.f32.gmra.mrb[0].mxu0 %v91
    %v222 = vpop.f32.mrb[0].mxu0
    %v223 = vadd.f32 0.0, %v222
    %v224 = vpop.f32.mrb[0].mxu0
    %225 = vmatprep.mubr.f32.mxu0 0.0
    %226 = vmatmul.mubr.f32.gmra.mrb[0].mxu0 %v94
    %v227 = vpop.f32.mrb[0].mxu0
    %v228 = vadd.f32 0.0, %v227
    %v229 = vpop.f32.mrb[0].mxu0
    %230 = vmatprep.mubr.f32.mxu0 0.0
    %231 = vmatmul.mubr.f32.gmra.mrb[0].mxu0 %v97
    %v232 = vpop.f32.mrb[0].mxu0
    %v233 = vadd.f32 0.0, %v232
    %v234 = vpop.f32.mrb[0].mxu0
    %235 = vmatprep.mubr.f32.mxu0 0.0
    %236 = vmatmul.mubr.f32.gmra.mrb[0].mxu0 %v100
    %v237 = vpop.f32.mrb[0].mxu0
    %v238 = vadd.f32 0.0, %v237
    %v239 = vpop.f32.mrb[0].mxu0
    %240 = vmatprep.mubr.f32.mxu0 0.0
    %241 = vmatmul.mubr.f32.gmra.mrb[0].mxu0 %v103
    %v242 = vpop.f32.mrb[0].mxu0
    %v243 = vadd.f32 0.0, %v242
    %v244 = vpop.f32.mrb[0].mxu0
    %245 = vmatprep.mubr.f32.mxu0 0.0
    %246 = vmatmul.mubr.f32.gmra.mrb[0].mxu0 %v106
    %v247 = vpop.f32.mrb[0].mxu0
    %v248 = vadd.f32 0.0, %v247
    %v249 = vpop.f32.mrb[0].mxu0
    %250 = vmatprep.mubr.f32.mxu0 0.0
    %251 = vmatmul.mubr.f32.gmra.mrb[0].mxu0 %v109
    %v252 = vpop.f32.mrb[0].mxu0
    %v253 = vadd.f32 0.0, %v252
    %v254 = vpop.f32.mrb[0].mxu0
    %255 = vdwg.mxu0
    %v257 = vsel %vm62, %v30, 0
    %v260 = vsel %vm62, %v31, 0
    %v263 = vsel %vm62, %v32, 0
    %v266 = vsel %vm62, %v33, 0
    %v269 = vsel %vm62, %v34, 0
    %v272 = vsel %vm62, %v35, 0
    %v275 = vsel %vm62, %v36, 0
    %v278 = vsel %vm62, %v37, 0
    %v281 = vsel %vm62, %v38, 0
    %v284 = vsel %vm62, %v39, 0
    %v287 = vsel %vm62, %v40, 0
    %v290 = vsel %vm62, %v41, 0
    %v293 = vsel %vm62, %v42, 0
    %v296 = vsel %vm62, %v43, 0
    %v299 = vsel %vm62, %v44, 0
    %v302 = vsel %vm62, %v45, 0
    %304 = vmatprep.subr.mxu0 0.0
    %305 = vmatpush1.msra.mxu0 %v19
    %306 = vmatprep.subr.mxu0 0.0
    %307 = vmatpush1.msra.mxu0 %v20
    %308 = vmatprep.subr.mxu0 0.0
    %309 = vmatpush1.msra.mxu0 0.0
    %310 = vmatprep.subr.mxu0 0.0
    %311 = vmatpush1.msra.mxu0 0.0
    %312 = vmatprep.subr.mxu0 0.0
    %313 = vmatpush1.msra.mxu0 0.0
    %314 = vmatprep.subr.mxu0 0.0
    %315 = vmatpush1.msra.mxu0 0.0
    %316 = vmatprep.subr.mxu0 0.0
    %317 = vmatpush1.msra.mxu0 0.0
    %318 = vmatprep.subr.mxu0 0.0
    %319 = vmatpush1.msra.mxu0 0.0
    %320 = vmatprep.subr.mxu0 0.0
    %321 = vmatpush1.msra.mxu0 0.0
    %322 = vmatprep.subr.mxu0 0.0
    %323 = vmatpush1.msra.mxu0 0.0
    %324 = vmatprep.subr.mxu0 0.0
    %325 = vmatpush1.msra.mxu0 0.0
    %326 = vmatprep.subr.mxu0 0.0
    %327 = vmatpush1.msra.mxu0 0.0
    %328 = vmatprep.subr.mxu0 0.0
    %329 = vmatpush1.msra.mxu0 0.0
    %330 = vmatprep.subr.mxu0 0.0
    %331 = vmatpush1.msra.mxu0 0.0
    %332 = vmatprep.subr.mxu0 0.0
    %333 = vmatpush1.msra.mxu0 0.0
    %334 = vmatprep.subr.mxu0 0.0
    %335 = vmatpush1.msra.mxu0 0.0
    %336 = vmatprep.subr.mxu0 0.0
    %337 = vmatpush1.msra.mxu0 0.0
    %338 = vmatprep.subr.mxu0 0.0
    %339 = vmatpush1.msra.mxu0 0.0
    %340 = vmatprep.subr.mxu0 0.0
    %341 = vmatpush1.msra.mxu0 0.0
    %342 = vmatprep.subr.mxu0 0.0
    %343 = vmatpush1.msra.mxu0 0.0
    %344 = vmatprep.subr.mxu0 0.0
    %345 = vmatpush1.msra.mxu0 0.0
    %346 = vmatprep.subr.mxu0 0.0
    %347 = vmatpush1.msra.mxu0 0.0
    %348 = vmatprep.subr.mxu0 0.0
    %349 = vmatpush1.msra.mxu0 0.0
    %350 = vmatprep.subr.mxu0 0.0
    %351 = vmatpush1.msra.mxu0 0.0
    %352 = vmatprep.subr.mxu0 0.0
    %353 = vmatpush1.msra.mxu0 0.0
    %354 = vmatprep.subr.mxu0 0.0
    %355 = vmatpush1.msra.mxu0 0.0
    %356 = vmatprep.subr.mxu0 0.0
    %357 = vmatpush1.msra.mxu0 0.0
    %358 = vmatprep.subr.mxu0 0.0
    %359 = vmatpush1.msra.mxu0 0.0
    %360 = vmatprep.subr.mxu0 0.0
    %361 = vmatpush1.msra.mxu0 0.0
    %362 = vmatprep.subr.mxu0 0.0
    %363 = vmatpush1.msra.mxu0 0.0
    %364 = vmatprep.subr.mxu0 0.0
    %365 = vmatpush1.msra.mxu0 0.0
    %366 = vmatprep.subr.mxu0 0.0
    %367 = vmatpush1.msra.mxu0 0.0
    %368 = vmatprep.mubr.f32.mxu0 0.0
    %369 = vmatmul.mubr.f32.gmra.mrb[0].mxu0 %v257
    %v370 = vpop.f32.mrb[0].mxu0
    %v371 = vadd.f32 %v178, %v370
    %v372 = vpop.f32.mrb[0].mxu0
    %373 = vmatprep.mubr.f32.mxu0 0.0
    %374 = vmatmul.mubr.f32.gmra.mrb[0].mxu0 %v260
    %v375 = vpop.f32.mrb[0].mxu0
    %v376 = vadd.f32 %v183, %v375
    %v377 = vpop.f32.mrb[0].mxu0
    %378 = vmatprep.mubr.f32.mxu0 0.0
    %379 = vmatmul.mubr.f32.gmra.mrb[0].mxu0 %v263
    %v380 = vpop.f32.mrb[0].mxu0
    %v381 = vadd.f32 %v188, %v380
    %v382 = vpop.f32.mrb[0].mxu0
    %383 = vmatprep.mubr.f32.mxu0 0.0
    %384 = vmatmul.mubr.f32.gmra.mrb[0].mxu0 %v266
    %v385 = vpop.f32.mrb[0].mxu0
    %v386 = vadd.f32 %v193, %v385
    %v387 = vpop.f32.mrb[0].mxu0
    %388 = vmatprep.mubr.f32.mxu0 0.0
    %389 = vmatmul.mubr.f32.gmra.mrb[0].mxu0 %v269
    %v390 = vpop.f32.mrb[0].mxu0
    %v391 = vadd.f32 %v198, %v390
    %v392 = vpop.f32.mrb[0].mxu0
    %393 = vmatprep.mubr.f32.mxu0 0.0
    %394 = vmatmul.mubr.f32.gmra.mrb[0].mxu0 %v272
    %v395 = vpop.f32.mrb[0].mxu0
    %v396 = vadd.f32 %v203, %v395
    %v397 = vpop.f32.mrb[0].mxu0
    %398 = vmatprep.mubr.f32.mxu0 0.0
    %399 = vmatmul.mubr.f32.gmra.mrb[0].mxu0 %v275
    %v400 = vpop.f32.mrb[0].mxu0
    %v401 = vadd.f32 %v208, %v400
    %v402 = vpop.f32.mrb[0].mxu0
    %403 = vmatprep.mubr.f32.mxu0 0.0
    %404 = vmatmul.mubr.f32.gmra.mrb[0].mxu0 %v278
    %v405 = vpop.f32.mrb[0].mxu0
    %v406 = vadd.f32 %v213, %v405
    %v407 = vpop.f32.mrb[0].mxu0
    %408 = vmatprep.mubr.f32.mxu0 0.0
    %409 = vmatmul.mubr.f32.gmra.mrb[0].mxu0 %v281
    %v410 = vpop.f32.mrb[0].mxu0
    %v411 = vadd.f32 %v218, %v410
    %v412 = vpop.f32.mrb[0].mxu0
    %413 = vmatprep.mubr.f32.mxu0 0.0
    %414 = vmatmul.mubr.f32.gmra.mrb[0].mxu0 %v284
    %v415 = vpop.f32.mrb[0].mxu0
    %v416 = vadd.f32 %v223, %v415
    %v417 = vpop.f32.mrb[0].mxu0
    %418 = vmatprep.mubr.f32.mxu0 0.0
    %419 = vmatmul.mubr.f32.gmra.mrb[0].mxu0 %v287
    %v420 = vpop.f32.mrb[0].mxu0
    %v421 = vadd.f32 %v228, %v420
    %v422 = vpop.f32.mrb[0].mxu0
    %423 = vmatprep.mubr.f32.mxu0 0.0
    %424 = vmatmul.mubr.f32.gmra.mrb[0].mxu0 %v290
    %v425 = vpop.f32.mrb[0].mxu0
    %v426 = vadd.f32 %v233, %v425
    %v427 = vpop.f32.mrb[0].mxu0
    %428 = vmatprep.mubr.f32.mxu0 0.0
    %429 = vmatmul.mubr.f32.gmra.mrb[0].mxu0 %v293
    %v430 = vpop.f32.mrb[0].mxu0
    %v431 = vadd.f32 %v238, %v430
    %v432 = vpop.f32.mrb[0].mxu0
    %433 = vmatprep.mubr.f32.mxu0 0.0
    %434 = vmatmul.mubr.f32.gmra.mrb[0].mxu0 %v296
    %v435 = vpop.f32.mrb[0].mxu0
    %v436 = vadd.f32 %v243, %v435
    %v437 = vpop.f32.mrb[0].mxu0
    %438 = vmatprep.mubr.f32.mxu0 0.0
    %439 = vmatmul.mubr.f32.gmra.mrb[0].mxu0 %v299
    %v440 = vpop.f32.mrb[0].mxu0
    %v441 = vadd.f32 %v248, %v440
    %v442 = vpop.f32.mrb[0].mxu0
    %443 = vmatprep.mubr.f32.mxu0 0.0
    %444 = vmatmul.mubr.f32.gmra.mrb[0].mxu0 %v302
    %v445 = vpop.f32.mrb[0].mxu0
    %v446 = vadd.f32 %v253, %v445
    %v447 = vpop.f32.mrb[0].mxu0
    %448 = vdwg.mxu0
    %v449 = vlaneseq
    %v450 = vshrl.u32 %v449, 7
    %v451 = vsub.s32 0, %v450
    %v452 = vrot.slane %v27, %v451
    %v453 = vadd.f32 %v371, %v452
    %v454 = vadd.f32 %v376, %v452
    %v455 = vadd.f32 %v381, %v452
    %v456 = vadd.f32 %v386, %v452
    %v457 = vadd.f32 %v391, %v452
    %v458 = vadd.f32 %v396, %v452
    %v459 = vadd.f32 %v401, %v452
    %v460 = vadd.f32 %v406, %v452
    %v461 = vadd.f32 %v411, %v452
    %v462 = vadd.f32 %v416, %v452
    %v463 = vadd.f32 %v421, %v452
    %v464 = vadd.f32 %v426, %v452
    %v465 = vadd.f32 %v431, %v452
    %v466 = vadd.f32 %v436, %v452
    %v467 = vadd.f32 %v441, %v452
    %v468 = vadd.f32 %v446, %v452
    %v469 = vmax.f32 %v453, 0.0
    %v470 = vmax.f32 %v454, 0.0
    %v471 = vmax.f32 %v455, 0.0
    %v472 = vmax.f32 %v456, 0.0
    %v473 = vmax.f32 %v457, 0.0
    %v474 = vmax.f32 %v458, 0.0
    %v475 = vmax.f32 %v459, 0.0
    %v476 = vmax.f32 %v460, 0.0
    %v477 = vmax.f32 %v461, 0.0
    %v478 = vmax.f32 %v462, 0.0
    %v479 = vmax.f32 %v463, 0.0
    %v480 = vmax.f32 %v464, 0.0
    %v481 = vmax.f32 %v465, 0.0
    %v482 = vmax.f32 %v466, 0.0
    %v483 = vmax.f32 %v467, 0.0
    %v484 = vmax.f32 %v468, 0.0
    %v485 = vlaneseq
    %v486 = vshrl.u32 %v485, 7
    %v487 = vsub.s32 0, %v486
    %v488 = vrot.slane %v28, %v487
    %vm489 = vcmask 261120
    %v491 = vsel %vm489, %v469, 0
    %v494 = vsel %vm489, %v470, 0
    %v497 = vsel %vm489, %v471, 0
    %v500 = vsel %vm489, %v472, 0
    %v503 = vsel %vm489, %v473, 0
    %v506 = vsel %vm489, %v474, 0
    %v509 = vsel %vm489, %v475, 0
    %v512 = vsel %vm489, %v476, 0
    %v515 = vsel %vm489, %v477, 0
    %v518 = vsel %vm489, %v478, 0
    %v521 = vsel %vm489, %v479, 0
    %v524 = vsel %vm489, %v480, 0
    %v527 = vsel %vm489, %v481, 0
    %v530 = vsel %vm489, %v482, 0
    %v533 = vsel %vm489, %v483, 0
    %v536 = vsel %vm489, %v484, 0
    %538 = vmatprep.subr.mxu0 0.0
    %539 = vmatpush1.msra.mxu0 %v23
    %540 = vmatprep.subr.mxu0 0.0
    %541 = vmatpush1.msra.mxu0 %v24
    %542 = vmatprep.subr.mxu0 0.0
    %543 = vmatpush1.msra.mxu0 %v25
    %544 = vmatprep.subr.mxu0 0.0
    %545 = vmatpush1.msra.mxu0 %v26
    %546 = vmatprep.subr.mxu0 0.0
    %547 = vmatpush1.msra.mxu0 0.0
    %548 = vmatprep.subr.mxu0 0.0
    %549 = vmatpush1.msra.mxu0 0.0
    %550 = vmatprep.subr.mxu0 0.0
    %551 = vmatpush1.msra.mxu0 0.0
    %552 = vmatprep.subr.mxu0 0.0
    %553 = vmatpush1.msra.mxu0 0.0
    %554 = vmatprep.subr.mxu0 0.0
    %555 = vmatpush1.msra.mxu0 0.0
    %556 = vmatprep.subr.mxu0 0.0
    %557 = vmatpush1.msra.mxu0 0.0
    %558 = vmatprep.subr.mxu0 0.0
    %559 = vmatpush1.msra.mxu0 0.0
    %560 = vmatprep.subr.mxu0 0.0
    %561 = vmatpush1.msra.mxu0 0.0
    %562 = vmatprep.subr.mxu0 0.0
    %563 = vmatpush1.msra.mxu0 0.0
    %564 = vmatprep.subr.mxu0 0.0
    %565 = vmatpush1.msra.mxu0 0.0
    %566 = vmatprep.subr.mxu0 0.0
    %567 = vmatpush1.msra.mxu0 0.0
    %568 = vmatprep.subr.mxu0 0.0
    %569 = vmatpush1.msra.mxu0 0.0
    %570 = vmatprep.subr.mxu0 0.0
    %571 = vmatpush1.msra.mxu0 0.0
    %572 = vmatprep.subr.mxu0 0.0
    %573 = vmatpush1.msra.mxu0 0.0
    %574 = vmatprep.subr.mxu0 0.0
    %575 = vmatpush1.msra.mxu0 0.0
    %576 = vmatprep.subr.mxu0 0.0
    %577 = vmatpush1.msra.mxu0 0.0
    %578 = vmatprep.subr.mxu0 0.0
    %579 = vmatpush1.msra.mxu0 0.0
    %580 = vmatprep.subr.mxu0 0.0
    %581 = vmatpush1.msra.mxu0 0.0
    %582 = vmatprep.subr.mxu0 0.0
    %583 = vmatpush1.msra.mxu0 0.0
    %584 = vmatprep.subr.mxu0 0.0
    %585 = vmatpush1.msra.mxu0 0.0
    %586 = vmatprep.subr.mxu0 0.0
    %587 = vmatpush1.msra.mxu0 0.0
    %588 = vmatprep.subr.mxu0 0.0
    %589 = vmatpush1.msra.mxu0 0.0
    %590 = vmatprep.subr.mxu0 0.0
    %591 = vmatpush1.msra.mxu0 0.0
    %592 = vmatprep.subr.mxu0 0.0
    %593 = vmatpush1.msra.mxu0 0.0
    %594 = vmatprep.subr.mxu0 0.0
    %595 = vmatpush1.msra.mxu0 0.0
    %596 = vmatprep.subr.mxu0 0.0
    %597 = vmatpush1.msra.mxu0 0.0
    %598 = vmatprep.subr.mxu0 0.0
    %599 = vmatpush1.msra.mxu0 0.0
    %600 = vmatprep.subr.mxu0 0.0
    %601 = vmatpush1.msra.mxu0 0.0
    %602 = vmatprep.mubr.f32.mxu0 0.0
    %603 = vmatmul.mubr.f32.gmra.mrb[0].mxu0 %v491
    %v604 = vpop.f32.mrb[0].mxu0
    %v605 = vadd.f32 %v488, %v604
    %v606 = vpop.f32.mrb[0].mxu0
    %607 = vmatprep.mubr.f32.mxu0 0.0
    %608 = vmatmul.mubr.f32.gmra.mrb[0].mxu0 %v494
    %v609 = vpop.f32.mrb[0].mxu0
    %v610 = vadd.f32 %v488, %v609
    %v611 = vpop.f32.mrb[0].mxu0
    %612 = vmatprep.mubr.f32.mxu0 0.0
    %613 = vmatmul.mubr.f32.gmra.mrb[0].mxu0 %v497
    %v614 = vpop.f32.mrb[0].mxu0
    %v615 = vadd.f32 %v488, %v614
    %v616 = vpop.f32.mrb[0].mxu0
    %617 = vmatprep.mubr.f32.mxu0 0.0
    %618 = vmatmul.mubr.f32.gmra.mrb[0].mxu0 %v500
    %v619 = vpop.f32.mrb[0].mxu0
    %v620 = vadd.f32 %v488, %v619
    %v621 = vpop.f32.mrb[0].mxu0
    %622 = vmatprep.mubr.f32.mxu0 0.0
    %623 = vmatmul.mubr.f32.gmra.mrb[0].mxu0 %v503
    %v624 = vpop.f32.mrb[0].mxu0
    %v625 = vadd.f32 %v488, %v624
    %v626 = vpop.f32.mrb[0].mxu0
    %627 = vmatprep.mubr.f32.mxu0 0.0
    %628 = vmatmul.mubr.f32.gmra.mrb[0].mxu0 %v506
    %v629 = vpop.f32.mrb[0].mxu0
    %v630 = vadd.f32 %v488, %v629
    %v631 = vpop.f32.mrb[0].mxu0
    %632 = vmatprep.mubr.f32.mxu0 0.0
    %633 = vmatmul.mubr.f32.gmra.mrb[0].mxu0 %v509
    %v634 = vpop.f32.mrb[0].mxu0
    %v635 = vadd.f32 %v488, %v634
    %v636 = vpop.f32.mrb[0].mxu0
    %637 = vmatprep.mubr.f32.mxu0 0.0
    %638 = vmatmul.mubr.f32.gmra.mrb[0].mxu0 %v512
    %v639 = vpop.f32.mrb[0].mxu0
    %v640 = vadd.f32 %v488, %v639
    %v641 = vpop.f32.mrb[0].mxu0
    %642 = vmatprep.mubr.f32.mxu0 0.0
    %643 = vmatmul.mubr.f32.gmra.mrb[0].mxu0 %v515
    %v644 = vpop.f32.mrb[0].mxu0
    %v645 = vadd.f32 %v488, %v644
    %v646 = vpop.f32.mrb[0].mxu0
    %647 = vmatprep.mubr.f32.mxu0 0.0
    %648 = vmatmul.mubr.f32.gmra.mrb[0].mxu0 %v518
    %v649 = vpop.f32.mrb[0].mxu0
    %v650 = vadd.f32 %v488, %v649
    %v651 = vpop.f32.mrb[0].mxu0
    %652 = vmatprep.mubr.f32.mxu0 0.0
    %653 = vmatmul.mubr.f32.gmra.mrb[0].mxu0 %v521
    %v654 = vpop.f32.mrb[0].mxu0
    %v655 = vadd.f32 %v488, %v654
    %v656 = vpop.f32.mrb[0].mxu0
    %657 = vmatprep.mubr.f32.mxu0 0.0
    %658 = vmatmul.mubr.f32.gmra.mrb[0].mxu0 %v524
    %v659 = vpop.f32.mrb[0].mxu0
    %v660 = vadd.f32 %v488, %v659
    %v661 = vpop.f32.mrb[0].mxu0
    %662 = vmatprep.mubr.f32.mxu0 0.0
    %663 = vmatmul.mubr.f32.gmra.mrb[0].mxu0 %v527
    %v664 = vpop.f32.mrb[0].mxu0
    %v665 = vadd.f32 %v488, %v664
    %v666 = vpop.f32.mrb[0].mxu0
    %667 = vmatprep.mubr.f32.mxu0 0.0
    %668 = vmatmul.mubr.f32.gmra.mrb[0].mxu0 %v530
    %v669 = vpop.f32.mrb[0].mxu0
    %v670 = vadd.f32 %v488, %v669
    %v671 = vpop.f32.mrb[0].mxu0
    %672 = vmatprep.mubr.f32.mxu0 0.0
    %673 = vmatmul.mubr.f32.gmra.mrb[0].mxu0 %v533
    %v674 = vpop.f32.mrb[0].mxu0
    %v675 = vadd.f32 %v488, %v674
    %v676 = vpop.f32.mrb[0].mxu0
    %677 = vmatprep.mubr.f32.mxu0 0.0
    %678 = vmatmul.mubr.f32.gmra.mrb[0].mxu0 %v536
    %v679 = vpop.f32.mrb[0].mxu0
    %v680 = vadd.f32 %v488, %v679
    %v681 = vpop.f32.mrb[0].mxu0
    %682 = vdwg.mxu0
    %v683 = vmax.f32 %v605, 0.0
    %v684 = vmax.f32 %v610, 0.0
    %v685 = vmax.f32 %v615, 0.0
    %v686 = vmax.f32 %v620, 0.0
    %v687 = vmax.f32 %v625, 0.0
    %v688 = vmax.f32 %v630, 0.0
    %v689 = vmax.f32 %v635, 0.0
    %v690 = vmax.f32 %v640, 0.0
    %v691 = vmax.f32 %v645, 0.0
    %v692 = vmax.f32 %v650, 0.0
    %v693 = vmax.f32 %v655, 0.0
    %v694 = vmax.f32 %v660, 0.0
    %v695 = vmax.f32 %v665, 0.0
    %v696 = vmax.f32 %v670, 0.0
    %v697 = vmax.f32 %v675, 0.0
    %v698 = vmax.f32 %v680, 0.0
    %s699 = sld [smem:[#allocation2]]
    %v700 = vstv %s699
    %v702 = vsel %vm489, %v29, 0
    %v705 = vsel %vm489, %v683, 0
    %v708 = vsel %vm489, %v684, 0
    %v711 = vsel %vm489, %v685, 0
    %v714 = vsel %vm489, %v686, 0
    %v717 = vsel %vm489, %v687, 0
    %v720 = vsel %vm489, %v688, 0
    %v723 = vsel %vm489, %v689, 0
    %v726 = vsel %vm489, %v690, 0
    %v729 = vsel %vm489, %v691, 0
    %v732 = vsel %vm489, %v692, 0
    %v735 = vsel %vm489, %v693, 0
    %v738 = vsel %vm489, %v694, 0
    %v741 = vsel %vm489, %v695, 0
    %v744 = vsel %vm489, %v696, 0
    %v747 = vsel %vm489, %v697, 0
    %v750 = vsel %vm489, %v698, 0
    %752 = vmatprep.subr.mxu0 0.0
    %753 = vmatpush1.xpose.msra.mxu0 %v705
    %754 = vmatprep.subr.mxu0 0.0
    %755 = vmatpush1.xpose.msra.mxu0 %v708
    %756 = vmatprep.subr.mxu0 0.0
    %757 = vmatpush1.xpose.msra.mxu0 %v711
    %758 = vmatprep.subr.mxu0 0.0
    %759 = vmatpush1.xpose.msra.mxu0 %v714
    %760 = vmatprep.subr.mxu0 0.0
    %761 = vmatpush1.xpose.msra.mxu0 %v717
    %762 = vmatprep.subr.mxu0 0.0
    %763 = vmatpush1.xpose.msra.mxu0 %v720
    %764 = vmatprep.subr.mxu0 0.0
    %765 = vmatpush1.xpose.msra.mxu0 %v723
    %766 = vmatprep.subr.mxu0 0.0
    %767 = vmatpush1.xpose.msra.mxu0 %v726
    %768 = vmatprep.subr.mxu0 0.0
    %769 = vmatpush1.xpose.msra.mxu0 %v729
    %770 = vmatprep.subr.mxu0 0.0
    %771 = vmatpush1.xpose.msra.mxu0 %v732
    %772 = vmatprep.subr.mxu0 0.0
    %773 = vmatpush1.xpose.msra.mxu0 %v735
    %774 = vmatprep.subr.mxu0 0.0
    %775 = vmatpush1.xpose.msra.mxu0 %v738
    %776 = vmatprep.subr.mxu0 0.0
    %777 = vmatpush1.xpose.msra.mxu0 %v741
    %778 = vmatprep.subr.mxu0 0.0
    %779 = vmatpush1.xpose.msra.mxu0 %v744
    %780 = vmatprep.subr.mxu0 0.0
    %781 = vmatpush1.xpose.msra.mxu0 %v747
    %782 = vmatprep.subr.mxu0 0.0
    %783 = vmatpush1.xpose.msra.mxu0 %v750
    %784 = vmatprep.subr.mxu0 0.0
    %785 = vmatpush1.xpose.msra.mxu0 0.0
    %786 = vmatprep.subr.mxu0 0.0
    %787 = vmatpush1.xpose.msra.mxu0 0.0
    %788 = vmatprep.subr.mxu0 0.0
    %789 = vmatpush1.xpose.msra.mxu0 0.0
    %790 = vmatprep.subr.mxu0 0.0
    %791 = vmatpush1.xpose.msra.mxu0 0.0
    %792 = vmatprep.subr.mxu0 0.0
    %793 = vmatpush1.xpose.msra.mxu0 0.0
    %794 = vmatprep.subr.mxu0 0.0
    %795 = vmatpush1.xpose.msra.mxu0 0.0
    %796 = vmatprep.subr.mxu0 0.0
    %797 = vmatpush1.xpose.msra.mxu0 0.0
    %798 = vmatprep.subr.mxu0 0.0
    %799 = vmatpush1.xpose.msra.mxu0 0.0
    %800 = vmatprep.subr.mxu0 0.0
    %801 = vmatpush1.xpose.msra.mxu0 0.0
    %802 = vmatprep.subr.mxu0 0.0
    %803 = vmatpush1.xpose.msra.mxu0 0.0
    %804 = vmatprep.subr.mxu0 0.0
    %805 = vmatpush1.xpose.msra.mxu0 0.0
    %806 = vmatprep.subr.mxu0 0.0
    %807 = vmatpush1.xpose.msra.mxu0 0.0
    %808 = vmatprep.subr.mxu0 0.0
    %809 = vmatpush1.xpose.msra.mxu0 0.0
    %810 = vmatprep.subr.mxu0 0.0
    %811 = vmatpush1.xpose.msra.mxu0 0.0
    %812 = vmatprep.subr.mxu0 0.0
    %813 = vmatpush1.xpose.msra.mxu0 0.0
    %814 = vmatprep.subr.mxu0 0.0
    %815 = vmatpush1.xpose.msra.mxu0 0.0
    %816 = vmatprep.mubr.f32.mxu0 0.0
    %817 = vmatmul.mubr.f32.gmra.mrb[0].mxu0 %v702
    %v818 = vpop.f32.mrb[0].mxu0
    %v819 = vadd.f32 %v700, %v818
    %v820 = vpop.f32.mrb[0].mxu0
    %821 = vdwg.mxu0
    %822 = vst [vmem:[#allocation3] sm:$0x1] %v819
    // Predicated region
    $region18: #{tpu_custom_call.1} parent=1 // pred_check
      _
    $region19: #{tpu_custom_call.1} parent=1 // pred_check_branch
      %824 = sbr.rel (0) target = $region21
    $region20: #{tpu_custom_call.1} parent=1 // pred_region
      %s826 = ssub.s32 16, 16
      %827 = vsyncadd [#allocation4], %s826
      %s829 = sshll.u32 [#allocation3], 4
      %s830 = int_to_ptr.vmem [resolvable:$true] %s829
      %832 = dma.vmem_to_hbm [thread:$0]  %s830, 16, %s4, [#allocation4]
    $region21: #{tpu_custom_call.1} parent=1 // pred_fallthru
      _
    // Predicated region
    $region22: #{tpu_custom_call.1} parent=1 // pred_check
      _
    $region23: #{tpu_custom_call.1} parent=1 // pred_check_branch
      %834 = sbr.rel (0) target = $region25
    $region24: #{tpu_custom_call.1} parent=1 // pred_region
      %835 = dma.done [#allocation4], 16
    $region25: #{tpu_custom_call.1} parent=1 // pred_fallthru
      _
    %836 = vsyncpa [#allocation4], 1

</llo_original>
